<compile_context>
chip_gen: v6e
topology: v6e:2x2x1
jax: 0.10.0
libtpu: 0.0.40
codegen_flags: <defaults>
</compile_context>

<pallas_src>
import functools

import jax
import jax.numpy as jnp
from jax.experimental import pallas as pl


# ---------------------------------------------------------------------------
# Fused Pallas kernel: entire VaeClassifierModel.forward in one invocation
# ---------------------------------------------------------------------------

def _fused_forward_kernel(x_ref, w1_ref, wm_ref, wd1_ref, wd2_ref, vec_ref, y_ref,
                          *, eps, slope, latent_dim, class_dim_1, class_num):
    """Whole forward pass; all intermediates live in VMEM / vregs.

    vec_ref rows (packed (1, D) vectors, one DMA, static slices):
      0: encoder bias (packed [b1B|b1A|b1C])   1: encoder gamma   2: encoder beta
      3: bmean[:latent_dim]                    4: bd1[:class_dim_1]
      5: gd1[:class_dim_1]                     6: bed1[:class_dim_1]
      7: bd2[:class_num]
    """
    h_total = w1_ref.shape[1]

    def bn_lrelu(z, g, beta):
        # Training-mode BatchNorm1d (biased batch variance) with gamma/beta
        # folded into a single per-feature scale/shift.
        mu = jnp.mean(z, axis=0, keepdims=True)               # (1, D)
        zc = z - mu
        var = jnp.mean(zc * zc, axis=0, keepdims=True)        # biased variance
        scale = g * jax.lax.rsqrt(var + eps)                  # rsqrt -> EUP slot
        shift = beta - mu * scale
        zn = z * scale + shift
        # LeakyReLU (valid for 0 <= slope <= 1): single max, no mask vreg.
        return jnp.maximum(zn, slope * zn)

    vec = vec_ref[...]                                        # (8, h_total), one load

    # --- fused encoder: blockdiag(W1B, W1A, W1C) -> one MXU dot + one BN pass
    z1 = (jnp.dot(x_ref[...], w1_ref[...], preferred_element_type=jnp.float32)
          + vec[0:1, 0:h_total])
    h = bn_lrelu(z1, vec[1:2, 0:h_total], vec[2:3, 0:h_total])   # = [h_B|h_A|h_C]

    # --- encode_fc_mean (no norm, no activation); latent = mean.detach()
    latent = (jnp.dot(h, wm_ref[...], preferred_element_type=jnp.float32)
              + vec[3:4, 0:latent_dim])

    # --- classifier input_fc (Linear + BN + LeakyReLU)
    zc1 = (jnp.dot(latent, wd1_ref[...], preferred_element_type=jnp.float32)
           + vec[4:5, 0:class_dim_1])
    c1 = bn_lrelu(zc1, vec[5:6, 0:class_dim_1], vec[6:7, 0:class_dim_1])

    # --- classifier output_fc (Linear); (8, class_num) masked store is fine.
    y = (jnp.dot(c1, wd2_ref[...], preferred_element_type=jnp.float32)
         + vec[7:8, 0:class_num])
    y_ref[...] = y.astype(y_ref.dtype)


# ---------------------------------------------------------------------------
# Wrapper: single grid-less pallas_call, full arrays resident in VMEM
# ---------------------------------------------------------------------------

def vae_classifier_forward(params, data_e, data_m, data_c, *,
                           leaky_slope=0.2, eps=1e-5):
    N = data_e.shape[0]
    latent_dim = params["Wmean"].shape[1]
    class_dim_1 = params["Wd1"].shape[1]
    class_num = params["Wd2"].shape[1]

    # Concat order [m | e | c] matches blockdiag(W1B, W1A, W1C) columns, which
    # reproduce PyTorch's torch.cat((h_B, h_A, h_C), 1) feature layout.
    x_cat = jnp.concatenate([data_m, data_e, data_c], axis=1)

    kernel = functools.partial(
        _fused_forward_kernel, eps=eps, slope=leaky_slope,
        latent_dim=latent_dim, class_dim_1=class_dim_1, class_num=class_num)

    # Grid-less call: one invocation, every operand fully resident in VMEM
    # (total footprint << 1 MiB on all generations).  The batch axis is
    # deliberately NOT sharded across a grid axis or v7x's two TensorCores:
    # BatchNorm statistics reduce over the whole batch (correctness guard).
    # TODO(synk): if omics dims are scaled to realistic sizes (10k-100k), add a
    # K-reduction grid axis ("arbitrary", last) for the first-layer weight with
    # double-buffered K-tiles (>=512 rows on v5e/v6e, ~half that on v7x's
    # 64 MiB VMEM, with explicit pltpu.CompilerParams(vmem_limit_bytes=...)),
    # optionally bf16 weights, and a "parallel" feature-tile axis for v7x's 2 TCs.
    return pl.pallas_call(
        kernel,
        out_shape=jax.ShapeDtypeStruct((N, class_num), jnp.float32),
    )(x_cat, params["W1"], params["Wmean"], params["Wd1"], params["Wd2"],
      params["vec"])


# ---------------------------------------------------------------------------
# Parameter construction (deterministic, PyTorch-like init shapes)
# ---------------------------------------------------------------------------

def _linear_params(key, in_dim, out_dim):
    kw, kb = jax.random.split(key)
    bound = 1.0 / jnp.sqrt(float(in_dim))
    # stored as [in, out] (i.e. W^T of the PyTorch weight)
    w = jax.random.uniform(kw, (in_dim, out_dim), jnp.float32, -bound, bound)
    b = jax.random.uniform(kb, (out_dim,), jnp.float32, -bound, bound)
    return w, b


def init_params(key, omics_dims, latent_dim, dim_1B, dim_1A, dim_1C,
                class_dim_1, class_num=1):
    A_dim, B_dim, C_dim = omics_dims
    keys = jax.random.split(key, 6)

    # Per-branch PyTorch-style init (fan_in of each branch), then fuse once.
    w1b, b1b = _linear_params(keys[0], B_dim, dim_1B)
    w1a, b1a = _linear_params(keys[1], A_dim, dim_1A)
    w1c, b1c = _linear_params(keys[2], C_dim, dim_1C)

    in_total = B_dim + A_dim + C_dim
    h_total = dim_1B + dim_1A + dim_1C

    # Block-diagonal fusion of the three encoder branches (done once at init).
    w1 = jnp.zeros((in_total, h_total), jnp.float32)
    w1 = w1.at[:B_dim, :dim_1B].set(w1b)
    w1 = w1.at[B_dim:B_dim + A_dim, dim_1B:dim_1B + dim_1A].set(w1a)
    w1 = w1.at[B_dim + A_dim:, dim_1B + dim_1A:].set(w1c)
    b1 = jnp.concatenate([b1b, b1a, b1c])
    g1 = jnp.ones((h_total,), jnp.float32)      # BN gamma init
    be1 = jnp.zeros((h_total,), jnp.float32)    # BN beta init

    # encode_fc_mean operates on concat([h_B, h_A, h_C]); its row order already
    # matches the fused hidden layout, so no split is needed.
    wmean, bmean = _linear_params(keys[3], h_total, latent_dim)
    wd1, bd1 = _linear_params(keys[4], latent_dim, class_dim_1)
    gd1 = jnp.ones((class_dim_1,), jnp.float32)
    bed1 = jnp.zeros((class_dim_1,), jnp.float32)
    wd2, bd2 = _linear_params(keys[5], class_dim_1, class_num)

    # Pack every (1, D) vector into ONE (8, W) slab: one operand, one padded
    # VMEM tile, one DMA.  Rows are statically indexed inside the kernel.
    W = max(h_total, latent_dim, class_dim_1, class_num)
    vec = jnp.zeros((8, W), jnp.float32)
    vec = vec.at[0, :h_total].set(b1)
    vec = vec.at[1, :h_total].set(g1)
    vec = vec.at[2, :h_total].set(be1)
    vec = vec.at[3, :latent_dim].set(bmean)
    vec = vec.at[4, :class_dim_1].set(bd1)
    vec = vec.at[5, :class_dim_1].set(gd1)
    vec = vec.at[6, :class_dim_1].set(bed1)
    vec = vec.at[7, :class_num].set(bd2)

    return {"W1": w1, "Wmean": wmean, "Wd1": wd1, "Wd2": wd2, "vec": vec}


# ---------------------------------------------------------------------------
# Main
# ---------------------------------------------------------------------------

if __name__ == "__main__":
    # Small, module-consistent shapes. batch=8 fills the sublane axis.
    batch = 8
    omics_dims = (40, 30, 50)        # (A_dim, B_dim, C_dim)
    dim_1A = dim_1B = dim_1C = 32
    latent_dim = 16
    class_dim_1 = 16
    class_num = 1                    # define_down(..., class_num=1, ...)
    leaky_slope = 0.2
    # dropout_p = 0 -> dropout layers are identity (omitted).

    key = jax.random.PRNGKey(0)
    k_param, k_e, k_m, k_c = jax.random.split(key, 4)

    params = init_params(k_param, omics_dims, latent_dim,
                         dim_1B, dim_1A, dim_1C, class_dim_1, class_num)

    data_e = jax.random.normal(k_e, (batch, omics_dims[0]), jnp.float32)  # A omics
    data_m = jax.random.normal(k_m, (batch, omics_dims[1]), jnp.float32)  # B omics
    data_c = jax.random.normal(k_c, (batch, omics_dims[2]), jnp.float32)  # C omics

    y_out = vae_classifier_forward(params, data_e, data_m, data_c,
                                   leaky_slope=leaky_slope)
    jax.block_until_ready(y_out)

    assert y_out.shape == (batch, class_num), y_out.shape
    assert y_out.dtype == jnp.float32
    assert bool(jnp.all(jnp.isfinite(y_out)))

    print("KERNEL_OK")
</pallas_src>

<mosaic_0001>
module attributes {stable_mosaic.version = 11 : i64} {
  func.func @_fused_forward_kernel(%arg0: memref<8x120xf32, #tpu.memory_space<vmem>>, %arg1: memref<120x96xf32, #tpu.memory_space<vmem>>, %arg2: memref<96x16xf32, #tpu.memory_space<vmem>>, %arg3: memref<16x16xf32, #tpu.memory_space<vmem>>, %arg4: memref<16x1xf32, #tpu.memory_space<vmem>>, %arg5: memref<8x96xf32, #tpu.memory_space<vmem>>, %arg6: memref<8x1xf32, #tpu.memory_space<vmem>>) attributes {dimension_semantics = [], scalar_prefetch = 0 : i64, scratch_operands = 0 : i64, tpu.core_type = #tpu.core_type<tc>} {
    %c0 = arith.constant 0 : index
    %c0_0 = arith.constant 0 : index
    %0 = vector.load %arg5[%c0, %c0_0] : memref<8x96xf32, #tpu.memory_space<vmem>>, vector<8x96xf32>
    %c0_1 = arith.constant 0 : index
    %c0_2 = arith.constant 0 : index
    %1 = vector.load %arg0[%c0_1, %c0_2] : memref<8x120xf32, #tpu.memory_space<vmem>>, vector<8x120xf32>
    %c0_3 = arith.constant 0 : index
    %c0_4 = arith.constant 0 : index
    %2 = vector.load %arg1[%c0_3, %c0_4] : memref<120x96xf32, #tpu.memory_space<vmem>>, vector<120x96xf32>
    %cst = arith.constant dense<0.000000e+00> : vector<8x96xf32>
    %3 = tpu.matmul %1, %2, %cst {dimension_numbers = #tpu.dot_dimension_numbers<[1], [0], [0], [1], [0, 0, 1, 1], [], []>} : vector<8x120xf32>, vector<120x96xf32>, vector<8x96xf32> -> vector<8x96xf32>
    %4 = vector.extract_strided_slice %0 {offsets = [0, 0], sizes = [1, 96], strides = [1, 1]} : vector<8x96xf32> to vector<1x96xf32>
    %5 = vector.broadcast %4 : vector<1x96xf32> to vector<8x96xf32>
    %6 = arith.addf %3, %5 : vector<8x96xf32>
    %7 = vector.extract_strided_slice %0 {offsets = [1, 0], sizes = [1, 96], strides = [1, 1]} : vector<8x96xf32> to vector<1x96xf32>
    %8 = vector.extract_strided_slice %0 {offsets = [2, 0], sizes = [1, 96], strides = [1, 1]} : vector<8x96xf32> to vector<1x96xf32>
    %cst_5 = arith.constant dense<0.000000e+00> : vector<96xf32>
    %9 = vector.multi_reduction <add>, %6, %cst_5 [0] : vector<8x96xf32> to vector<96xf32>
    %10 = vector.shape_cast %9 : vector<96xf32> to vector<1x96xf32>
    %cst_6 = arith.constant 8.000000e+00 : f32
    %11 = vector.broadcast %cst_6 : f32 to vector<1x96xf32>
    %12 = arith.divf %10, %11 : vector<1x96xf32>
    %13 = vector.broadcast %12 : vector<1x96xf32> to vector<8x96xf32>
    %14 = arith.subf %6, %13 : vector<8x96xf32>
    %15 = arith.mulf %14, %14 : vector<8x96xf32>
    %cst_7 = arith.constant dense<0.000000e+00> : vector<96xf32>
    %16 = vector.multi_reduction <add>, %15, %cst_7 [0] : vector<8x96xf32> to vector<96xf32>
    %17 = vector.shape_cast %16 : vector<96xf32> to vector<1x96xf32>
    %cst_8 = arith.constant 8.000000e+00 : f32
    %18 = vector.broadcast %cst_8 : f32 to vector<1x96xf32>
    %19 = arith.divf %17, %18 : vector<1x96xf32>
    %cst_9 = arith.constant 9.99999974E-6 : f32
    %20 = vector.broadcast %cst_9 : f32 to vector<1x96xf32>
    %21 = arith.addf %19, %20 : vector<1x96xf32>
    %22 = math.rsqrt %21 : vector<1x96xf32>
    %23 = arith.mulf %7, %22 : vector<1x96xf32>
    %24 = arith.mulf %12, %23 : vector<1x96xf32>
    %25 = arith.subf %8, %24 : vector<1x96xf32>
    %26 = vector.broadcast %23 : vector<1x96xf32> to vector<8x96xf32>
    %27 = arith.mulf %6, %26 : vector<8x96xf32>
    %28 = vector.broadcast %25 : vector<1x96xf32> to vector<8x96xf32>
    %29 = arith.addf %27, %28 : vector<8x96xf32>
    %cst_10 = arith.constant 2.000000e-01 : f32
    %30 = vector.broadcast %cst_10 : f32 to vector<8x96xf32>
    %31 = arith.mulf %30, %29 : vector<8x96xf32>
    %32 = arith.maximumf %29, %31 : vector<8x96xf32>
    %c0_11 = arith.constant 0 : index
    %c0_12 = arith.constant 0 : index
    %33 = vector.load %arg2[%c0_11, %c0_12] : memref<96x16xf32, #tpu.memory_space<vmem>>, vector<96x16xf32>
    %cst_13 = arith.constant dense<0.000000e+00> : vector<8x16xf32>
    %34 = tpu.matmul %32, %33, %cst_13 {dimension_numbers = #tpu.dot_dimension_numbers<[1], [0], [0], [1], [0, 0, 1, 1], [], []>} : vector<8x96xf32>, vector<96x16xf32>, vector<8x16xf32> -> vector<8x16xf32>
    %35 = vector.extract_strided_slice %0 {offsets = [3, 0], sizes = [1, 16], strides = [1, 1]} : vector<8x96xf32> to vector<1x16xf32>
    %36 = vector.broadcast %35 : vector<1x16xf32> to vector<8x16xf32>
    %37 = arith.addf %34, %36 : vector<8x16xf32>
    %c0_14 = arith.constant 0 : index
    %c0_15 = arith.constant 0 : index
    %38 = vector.load %arg3[%c0_14, %c0_15] : memref<16x16xf32, #tpu.memory_space<vmem>>, vector<16x16xf32>
    %cst_16 = arith.constant dense<0.000000e+00> : vector<8x16xf32>
    %39 = tpu.matmul %37, %38, %cst_16 {dimension_numbers = #tpu.dot_dimension_numbers<[1], [0], [0], [1], [0, 0, 1, 1], [], []>} : vector<8x16xf32>, vector<16x16xf32>, vector<8x16xf32> -> vector<8x16xf32>
    %40 = vector.extract_strided_slice %0 {offsets = [4, 0], sizes = [1, 16], strides = [1, 1]} : vector<8x96xf32> to vector<1x16xf32>
    %41 = vector.broadcast %40 : vector<1x16xf32> to vector<8x16xf32>
    %42 = arith.addf %39, %41 : vector<8x16xf32>
    %43 = vector.extract_strided_slice %0 {offsets = [5, 0], sizes = [1, 16], strides = [1, 1]} : vector<8x96xf32> to vector<1x16xf32>
    %44 = vector.extract_strided_slice %0 {offsets = [6, 0], sizes = [1, 16], strides = [1, 1]} : vector<8x96xf32> to vector<1x16xf32>
    %cst_17 = arith.constant dense<0.000000e+00> : vector<16xf32>
    %45 = vector.multi_reduction <add>, %42, %cst_17 [0] : vector<8x16xf32> to vector<16xf32>
    %46 = vector.shape_cast %45 : vector<16xf32> to vector<1x16xf32>
    %cst_18 = arith.constant 8.000000e+00 : f32
    %47 = vector.broadcast %cst_18 : f32 to vector<1x16xf32>
    %48 = arith.divf %46, %47 : vector<1x16xf32>
    %49 = vector.broadcast %48 : vector<1x16xf32> to vector<8x16xf32>
    %50 = arith.subf %42, %49 : vector<8x16xf32>
    %51 = arith.mulf %50, %50 : vector<8x16xf32>
    %cst_19 = arith.constant dense<0.000000e+00> : vector<16xf32>
    %52 = vector.multi_reduction <add>, %51, %cst_19 [0] : vector<8x16xf32> to vector<16xf32>
    %53 = vector.shape_cast %52 : vector<16xf32> to vector<1x16xf32>
    %cst_20 = arith.constant 8.000000e+00 : f32
    %54 = vector.broadcast %cst_20 : f32 to vector<1x16xf32>
    %55 = arith.divf %53, %54 : vector<1x16xf32>
    %cst_21 = arith.constant 9.99999974E-6 : f32
    %56 = vector.broadcast %cst_21 : f32 to vector<1x16xf32>
    %57 = arith.addf %55, %56 : vector<1x16xf32>
    %58 = math.rsqrt %57 : vector<1x16xf32>
    %59 = arith.mulf %43, %58 : vector<1x16xf32>
    %60 = arith.mulf %48, %59 : vector<1x16xf32>
    %61 = arith.subf %44, %60 : vector<1x16xf32>
    %62 = vector.broadcast %59 : vector<1x16xf32> to vector<8x16xf32>
    %63 = arith.mulf %42, %62 : vector<8x16xf32>
    %64 = vector.broadcast %61 : vector<1x16xf32> to vector<8x16xf32>
    %65 = arith.addf %63, %64 : vector<8x16xf32>
    %cst_22 = arith.constant 2.000000e-01 : f32
    %66 = vector.broadcast %cst_22 : f32 to vector<8x16xf32>
    %67 = arith.mulf %66, %65 : vector<8x16xf32>
    %68 = arith.maximumf %65, %67 : vector<8x16xf32>
    %c0_23 = arith.constant 0 : index
    %c0_24 = arith.constant 0 : index
    %69 = vector.load %arg4[%c0_23, %c0_24] : memref<16x1xf32, #tpu.memory_space<vmem>>, vector<16x1xf32>
    %cst_25 = arith.constant dense<0.000000e+00> : vector<8x1xf32>
    %70 = tpu.matmul %68, %69, %cst_25 {dimension_numbers = #tpu.dot_dimension_numbers<[1], [0], [0], [1], [0, 0, 1, 1], [], []>} : vector<8x16xf32>, vector<16x1xf32>, vector<8x1xf32> -> vector<8x1xf32>
    %71 = vector.extract_strided_slice %0 {offsets = [7, 0], sizes = [1, 1], strides = [1, 1]} : vector<8x96xf32> to vector<1x1xf32>
    %72 = vector.broadcast %71 : vector<1x1xf32> to vector<8x1xf32>
    %73 = arith.addf %70, %72 : vector<8x1xf32>
    %c0_26 = arith.constant 0 : index
    %c0_27 = arith.constant 0 : index
    %74 = vector.load %arg6[%c0_26, %c0_27] : memref<8x1xf32, #tpu.memory_space<vmem>>, vector<8x1xf32>
    tpu.vector_store %arg6[%c0_26, %c0_27], %73 {strides = array<i32>} : memref<8x1xf32, #tpu.memory_space<vmem>>, vector<8x1xf32>,
    return
  }
}

</mosaic_0001>

<llo_original>
// kernel: tpu_custom_call.1
$region0: #{tpu_custom_call.1}
  #allocation0 [shape = 'u32[]', space=smem, size = 0x4, offset = 0x4, fixed_abs, tag = 'smem constant byte address 0x4 - core index']
  #allocation1 [shape = 'u32[144,128]{1,0:T(1,128)}', space=vmem, size = 0x12000, scoped, tag = 'internal scratch']
  %s0 = inlined_call_operand.vmem [shape: f32[8,120], index: 0, kind: input, shape index: {}]
  %s1 = inlined_call_operand.vmem [shape: f32[120,96], index: 1, kind: input, shape index: {}]
  %s2 = inlined_call_operand.vmem [shape: f32[96,16], index: 2, kind: input, shape index: {}]
  %s3 = inlined_call_operand.vmem [shape: f32[16,16], index: 3, kind: input, shape index: {}]
  %s4 = inlined_call_operand.vmem [shape: f32[16,1], index: 4, kind: input, shape index: {}]
  %s5 = inlined_call_operand.vmem [shape: f32[8,96], index: 5, kind: input, shape index: {}]
  %s6 = inlined_call_operand.vmem [shape: f32[8,1], index: 6, kind: output, shape index: {}]
  %s7 = sld [smem:[#allocation0]]
  $region34: #{tpu_custom_call.1} parent=0
    _
  %s9 = ssub.s32 1, %s7
  %s10 = scalar_select 0, %s9, %s7
  // Predicated region
  $region2: #{tpu_custom_call.1} parent=0 // pred_check
    _
  $region3: #{tpu_custom_call.1} parent=0 // pred_check_branch
    %12 = sbr.rel (0) target = $region5
  $region4: #{tpu_custom_call.1} parent=0 // pred_region
    _
  $region5: #{tpu_custom_call.1} parent=0 // pred_fallthru
    _
  // Predicated region
  $region6: #{tpu_custom_call.1} parent=0 // pred_check
    _
  $region7: #{tpu_custom_call.1} parent=0 // pred_check_branch
    %14 = sbr.rel (0) target = $region9
  $region8: #{tpu_custom_call.1} parent=0 // pred_region
    _
  $region9: #{tpu_custom_call.1} parent=0 // pred_fallthru
    _
  // Predicated region
  $region10: #{tpu_custom_call.1} parent=0 // pred_check
    _
  $region11: #{tpu_custom_call.1} parent=0 // pred_check_branch
    %16 = sbr.rel (0) target = $region13
  $region12: #{tpu_custom_call.1} parent=0 // pred_region
    _
  $region13: #{tpu_custom_call.1} parent=0 // pred_fallthru
    _
  // Predicated region
  $region14: #{tpu_custom_call.1} parent=0 // pred_check
    _
  $region15: #{tpu_custom_call.1} parent=0 // pred_check_branch
    %18 = sbr.rel (0) target = $region17
  $region16: #{tpu_custom_call.1} parent=0 // pred_region
    _
  $region17: #{tpu_custom_call.1} parent=0 // pred_fallthru
    _
  // Predicated region
  $region18: #{tpu_custom_call.1} parent=0 // pred_check
    _
  $region19: #{tpu_custom_call.1} parent=0 // pred_check_branch
    %20 = sbr.rel (0) target = $region21
  $region20: #{tpu_custom_call.1} parent=0 // pred_region
    _
  $region21: #{tpu_custom_call.1} parent=0 // pred_fallthru
    _
  // Predicated region
  $region22: #{tpu_custom_call.1} parent=0 // pred_check
    _
  $region23: #{tpu_custom_call.1} parent=0 // pred_check_branch
    %22 = sbr.rel (0) target = $region25
  $region24: #{tpu_custom_call.1} parent=0 // pred_region
    _
  $region25: #{tpu_custom_call.1} parent=0 // pred_fallthru
    _
  %v23 = vld [vmem:[%s5] sm:$0xff]
  %v24 = vld [vmem:[%s0] sm:$0xff]
  %v25 = vld [vmem:[%s1] sm:$0xff]
  %v26 = vld [vmem:[%s1 + $0x8] sm:$0xff]
  %v27 = vld [vmem:[%s1 + $0x10] sm:$0xff]
  %v28 = vld [vmem:[%s1 + $0x18] sm:$0xff]
  %v29 = vld [vmem:[%s1 + $0x20] sm:$0xff]
  %v30 = vld [vmem:[%s1 + $0x28] sm:$0xff]
  %v31 = vld [vmem:[%s1 + $0x30] sm:$0xff]
  %v32 = vld [vmem:[%s1 + $0x38] sm:$0xff]
  %v33 = vld [vmem:[%s1 + $0x40] sm:$0xff]
  %v34 = vld [vmem:[%s1 + $0x48] sm:$0xff]
  %v35 = vld [vmem:[%s1 + $0x50] sm:$0xff]
  %v36 = vld [vmem:[%s1 + $0x58] sm:$0xff]
  %v37 = vld [vmem:[%s1 + $0x60] sm:$0xff]
  %v38 = vld [vmem:[%s1 + $0x68] sm:$0xff]
  %v39 = vld [vmem:[%s1 + $0x70] sm:$0xff]
  %v40 = vlaneseq
  %v41 = vshrl.u32 %v40, 7
  %v42 = vsub.s32 0, %v41
  %v43 = vrot.slane %v23, %v42
  %vm44 = vcmask 982016
  %v46 = vsel %vm44, %v24, 0
  %48 = vmatprep.subr.mxu0 0.0
  %49 = vmatpush1.msra.mxu0 0.0
  %50 = vmatprep.subr.mxu0 0.0
  %51 = vmatpush1.msra.mxu0 %v39
  %52 = vmatprep.subr.mxu0 0.0
  %53 = vmatpush1.msra.mxu0 %v38
  %54 = vmatprep.subr.mxu0 0.0
  %55 = vmatpush1.msra.mxu0 %v37
  %56 = vmatprep.subr.mxu0 0.0
  %57 = vmatpush1.msra.mxu0 %v36
  %58 = vmatprep.subr.mxu0 0.0
  %59 = vmatpush1.msra.mxu0 %v35
  %60 = vmatprep.subr.mxu0 0.0
  %61 = vmatpush1.msra.mxu0 %v34
  %62 = vmatprep.subr.mxu0 0.0
  %63 = vmatpush1.msra.mxu0 %v33
  %64 = vmatprep.subr.mxu0 0.0
  %65 = vmatpush1.msra.mxu0 %v32
  %66 = vmatprep.subr.mxu0 0.0
  %67 = vmatpush1.msra.mxu0 %v31
  %68 = vmatprep.subr.mxu0 0.0
  %69 = vmatpush1.msra.mxu0 %v30
  %70 = vmatprep.subr.mxu0 0.0
  %71 = vmatpush1.msra.mxu0 %v29
  %72 = vmatprep.subr.mxu0 0.0
  %73 = vmatpush1.msra.mxu0 %v28
  %74 = vmatprep.subr.mxu0 0.0
  %75 = vmatpush1.msra.mxu0 %v27
  %76 = vmatprep.subr.mxu0 0.0
  %77 = vmatpush1.msra.mxu0 %v26
  %78 = vmatprep.subr.mxu0 0.0
  %79 = vmatpush1.msra.mxu0 %v25
  %80 = vmatprep.subr.mxu0 0.0
  %81 = vmatpush2.msra.mxu0 0.0
  %82 = vmatprep.subr.mxu0 0.0
  %83 = vmatpush2.msra.mxu0 0.0
  %84 = vmatprep.subr.mxu0 0.0
  %85 = vmatpush2.msra.mxu0 0.0
  %86 = vmatprep.subr.mxu0 0.0
  %87 = vmatpush2.msra.mxu0 0.0
  %88 = vmatprep.subr.mxu0 0.0
  %89 = vmatpush2.msra.mxu0 0.0
  %90 = vmatprep.subr.mxu0 0.0
  %91 = vmatpush2.msra.mxu0 0.0
  %92 = vmatprep.subr.mxu0 0.0
  %93 = vmatpush2.msra.mxu0 0.0
  %94 = vmatprep.subr.mxu0 0.0
  %95 = vmatpush2.msra.mxu0 0.0
  %96 = vmatprep.subr.mxu0 0.0
  %97 = vmatpush2.msra.mxu0 0.0
  %98 = vmatprep.subr.mxu0 0.0
  %99 = vmatpush2.msra.mxu0 0.0
  %100 = vmatprep.subr.mxu0 0.0
  %101 = vmatpush2.msra.mxu0 0.0
  %102 = vmatprep.subr.mxu0 0.0
  %103 = vmatpush2.msra.mxu0 0.0
  %104 = vmatprep.subr.mxu0 0.0
  %105 = vmatpush2.msra.mxu0 0.0
  %106 = vmatprep.subr.mxu0 0.0
  %107 = vmatpush2.msra.mxu0 0.0
  %108 = vmatprep.subr.mxu0 0.0
  %109 = vmatpush2.msra.mxu0 0.0
  %110 = vmatprep.subr.mxu0 0.0
  %111 = vmatpush2.msra.mxu0 0.0
  %112 = vmatprep.mubr.f32.mxu0 0.0
  %113 = vmatmul.mubr.f32.gmra.mxu0 %v46
  %v114 = vpop.f32.mrf.mxu0
  %v115 = vadd.f32 %v43, %v114
  %v116 = vpop.f32.mrf.mxu0
  %117 = vdwg.mxu0
  %vm118 = vcmask 785408
  %v119 = vsel %vm118, %v115, 0.0
  %v120 = vrot.slane %v119, 4
  %v121 = vadd.f32 %v119, %v120
  %v122 = vrot.slane %v121, 2
  %v123 = vadd.f32 %v121, %v122
  %v124 = vrot.slane %v123, 1
  %v125 = vadd.f32 %v123, %v124
  %v126 = vrcp.pop 8.0
  %v127 = vmul.f32 %v125, %v126
  %v128 = vsub.f32 %v115, %v127
  %v129 = vmul.f32 %v128, %v128
  %v130 = vsel %vm118, %v129, 0.0
  %v131 = vrot.slane %v130, 4
  %v132 = vadd.f32 %v130, %v131
  %v133 = vrot.slane %v132, 2
  %v134 = vadd.f32 %v132, %v133
  %v135 = vrot.slane %v134, 1
  %v136 = vadd.f32 %v134, %v135
  %v137 = vmul.f32 %v136, %v126
  %v138 = vadd.f32 %v137, 1e-05
  %v139 = vrsqrt.pop %v138
  %v140 = vmul.f32 %v23, %v139
  %v141 = vmul.f32 %v127, %v140
  %v143 = vrot.slane %v141, 7
  %v145 = vsub.f32 %v23, %v143
  %v146 = vlaneseq
  %v147 = vshrl.u32 %v146, 7
  %v148 = vsub.s32 1, %v147
  %v149 = vrot.slane %v140, %v148
  %v150 = vmul.f32 %v115, %v149
  %v151 = vlaneseq
  %v152 = vshrl.u32 %v151, 7
  %v153 = vsub.s32 2, %v152
  %v154 = vrot.slane %v145, %v153
  %v155 = vadd.f32 %v150, %v154
  %v156 = vmul.f32 %v155, 0.2
  %v157 = vmax.f32 %v155, %v156
  %v158 = vld [vmem:[%s2] sm:$0xff]
  %v159 = vld [vmem:[%s2 + $0x8] sm:$0xff]
  %v160 = vld [vmem:[%s2 + $0x10] sm:$0xff]
  %v161 = vld [vmem:[%s2 + $0x18] sm:$0xff]
  %v162 = vld [vmem:[%s2 + $0x20] sm:$0xff]
  %v163 = vld [vmem:[%s2 + $0x28] sm:$0xff]
  %v164 = vld [vmem:[%s2 + $0x30] sm:$0xff]
  %v165 = vld [vmem:[%s2 + $0x38] sm:$0xff]
  %v166 = vld [vmem:[%s2 + $0x40] sm:$0xff]
  %v167 = vld [vmem:[%s2 + $0x48] sm:$0xff]
  %v168 = vld [vmem:[%s2 + $0x50] sm:$0xff]
  %v169 = vld [vmem:[%s2 + $0x58] sm:$0xff]
  %v170 = vlaneseq
  %v171 = vshrl.u32 %v170, 7
  %v172 = vsub.s32 3, %v171
  %v173 = vrot.slane %v23, %v172
  %v175 = vsel %vm118, %v157, 0
  %177 = vmatprep.subr.mxu0 0.0
  %178 = vmatpush1.msra.mxu0 0.0
  %179 = vmatprep.subr.mxu0 0.0
  %180 = vmatpush1.msra.mxu0 0.0
  %181 = vmatprep.subr.mxu0 0.0
  %182 = vmatpush1.msra.mxu0 0.0
  %183 = vmatprep.subr.mxu0 0.0
  %184 = vmatpush1.msra.mxu0 0.0
  %185 = vmatprep.subr.mxu0 0.0
  %186 = vmatpush1.msra.mxu0 %v169
  %187 = vmatprep.subr.mxu0 0.0
  %188 = vmatpush1.msra.mxu0 %v168
  %189 = vmatprep.subr.mxu0 0.0
  %190 = vmatpush1.msra.mxu0 %v167
  %191 = vmatprep.subr.mxu0 0.0
  %192 = vmatpush1.msra.mxu0 %v166
  %193 = vmatprep.subr.mxu0 0.0
  %194 = vmatpush1.msra.mxu0 %v165
  %195 = vmatprep.subr.mxu0 0.0
  %196 = vmatpush1.msra.mxu0 %v164
  %197 = vmatprep.subr.mxu0 0.0
  %198 = vmatpush1.msra.mxu0 %v163
  %199 = vmatprep.subr.mxu0 0.0
  %200 = vmatpush1.msra.mxu0 %v162
  %201 = vmatprep.subr.mxu0 0.0
  %202 = vmatpush1.msra.mxu0 %v161
  %203 = vmatprep.subr.mxu0 0.0
  %204 = vmatpush1.msra.mxu0 %v160
  %205 = vmatprep.subr.mxu0 0.0
  %206 = vmatpush1.msra.mxu0 %v159
  %207 = vmatprep.subr.mxu0 0.0
  %208 = vmatpush1.msra.mxu0 %v158
  %209 = vmatprep.subr.mxu0 0.0
  %210 = vmatpush2.msra.mxu0 0.0
  %211 = vmatprep.subr.mxu0 0.0
  %212 = vmatpush2.msra.mxu0 0.0
  %213 = vmatprep.subr.mxu0 0.0
  %214 = vmatpush2.msra.mxu0 0.0
  %215 = vmatprep.subr.mxu0 0.0
  %216 = vmatpush2.msra.mxu0 0.0
  %217 = vmatprep.subr.mxu0 0.0
  %218 = vmatpush2.msra.mxu0 0.0
  %219 = vmatprep.subr.mxu0 0.0
  %220 = vmatpush2.msra.mxu0 0.0
  %221 = vmatprep.subr.mxu0 0.0
  %222 = vmatpush2.msra.mxu0 0.0
  %223 = vmatprep.subr.mxu0 0.0
  %224 = vmatpush2.msra.mxu0 0.0
  %225 = vmatprep.subr.mxu0 0.0
  %226 = vmatpush2.msra.mxu0 0.0
  %227 = vmatprep.subr.mxu0 0.0
  %228 = vmatpush2.msra.mxu0 0.0
  %229 = vmatprep.subr.mxu0 0.0
  %230 = vmatpush2.msra.mxu0 0.0
  %231 = vmatprep.subr.mxu0 0.0
  %232 = vmatpush2.msra.mxu0 0.0
  %233 = vmatprep.subr.mxu0 0.0
  %234 = vmatpush2.msra.mxu0 0.0
  %235 = vmatprep.subr.mxu0 0.0
  %236 = vmatpush2.msra.mxu0 0.0
  %237 = vmatprep.subr.mxu0 0.0
  %238 = vmatpush2.msra.mxu0 0.0
  %239 = vmatprep.subr.mxu0 0.0
  %240 = vmatpush2.msra.mxu0 0.0
  %241 = vmatprep.mubr.f32.mxu0 0.0
  %242 = vmatmul.mubr.f32.gmra.mxu0 %v175
  %v243 = vpop.f32.mrf.mxu0
  %v244 = vadd.f32 %v173, %v243
  %v245 = vpop.f32.mrf.mxu0
  %246 = vdwg.mxu0
  %v247 = vld [vmem:[%s3] sm:$0xff]
  %v248 = vld [vmem:[%s3 + $0x8] sm:$0xff]
  %v249 = vlaneseq
  %v250 = vshrl.u32 %v249, 7
  %v251 = vsub.s32 4, %v250
  %v252 = vrot.slane %v23, %v251
  %vm253 = vcmask 130048
  %v255 = vsel %vm253, %v244, 0
  %257 = vmatprep.subr.mxu0 0.0
  %258 = vmatpush1.msra.mxu0 0.0
  %259 = vmatprep.subr.mxu0 0.0
  %260 = vmatpush1.msra.mxu0 0.0
  %261 = vmatprep.subr.mxu0 0.0
  %262 = vmatpush1.msra.mxu0 0.0
  %263 = vmatprep.subr.mxu0 0.0
  %264 = vmatpush1.msra.mxu0 0.0
  %265 = vmatprep.subr.mxu0 0.0
  %266 = vmatpush1.msra.mxu0 0.0
  %267 = vmatprep.subr.mxu0 0.0
  %268 = vmatpush1.msra.mxu0 0.0
  %269 = vmatprep.subr.mxu0 0.0
  %270 = vmatpush1.msra.mxu0 0.0
  %271 = vmatprep.subr.mxu0 0.0
  %272 = vmatpush1.msra.mxu0 0.0
  %273 = vmatprep.subr.mxu0 0.0
  %274 = vmatpush1.msra.mxu0 0.0
  %275 = vmatprep.subr.mxu0 0.0
  %276 = vmatpush1.msra.mxu0 0.0
  %277 = vmatprep.subr.mxu0 0.0
  %278 = vmatpush1.msra.mxu0 0.0
  %279 = vmatprep.subr.mxu0 0.0
  %280 = vmatpush1.msra.mxu0 0.0
  %281 = vmatprep.subr.mxu0 0.0
  %282 = vmatpush1.msra.mxu0 0.0
  %283 = vmatprep.subr.mxu0 0.0
  %284 = vmatpush1.msra.mxu0 0.0
  %285 = vmatprep.subr.mxu0 0.0
  %286 = vmatpush1.msra.mxu0 %v248
  %287 = vmatprep.subr.mxu0 0.0
  %288 = vmatpush1.msra.mxu0 %v247
  %289 = vmatprep.subr.mxu0 0.0
  %290 = vmatpush2.msra.mxu0 0.0
  %291 = vmatprep.subr.mxu0 0.0
  %292 = vmatpush2.msra.mxu0 0.0
  %293 = vmatprep.subr.mxu0 0.0
  %294 = vmatpush2.msra.mxu0 0.0
  %295 = vmatprep.subr.mxu0 0.0
  %296 = vmatpush2.msra.mxu0 0.0
  %297 = vmatprep.subr.mxu0 0.0
  %298 = vmatpush2.msra.mxu0 0.0
  %299 = vmatprep.subr.mxu0 0.0
  %300 = vmatpush2.msra.mxu0 0.0
  %301 = vmatprep.subr.mxu0 0.0
  %302 = vmatpush2.msra.mxu0 0.0
  %303 = vmatprep.subr.mxu0 0.0
  %304 = vmatpush2.msra.mxu0 0.0
  %305 = vmatprep.subr.mxu0 0.0
  %306 = vmatpush2.msra.mxu0 0.0
  %307 = vmatprep.subr.mxu0 0.0
  %308 = vmatpush2.msra.mxu0 0.0
  %309 = vmatprep.subr.mxu0 0.0
  %310 = vmatpush2.msra.mxu0 0.0
  %311 = vmatprep.subr.mxu0 0.0
  %312 = vmatpush2.msra.mxu0 0.0
  %313 = vmatprep.subr.mxu0 0.0
  %314 = vmatpush2.msra.mxu0 0.0
  %315 = vmatprep.subr.mxu0 0.0
  %316 = vmatpush2.msra.mxu0 0.0
  %317 = vmatprep.subr.mxu0 0.0
  %318 = vmatpush2.msra.mxu0 0.0
  %319 = vmatprep.subr.mxu0 0.0
  %320 = vmatpush2.msra.mxu0 0.0
  %321 = vmatprep.mubr.f32.mxu0 0.0
  %322 = vmatmul.mubr.f32.gmra.mxu0 %v255
  %v323 = vpop.f32.mrf.mxu0
  %v324 = vadd.f32 %v252, %v323
  %v325 = vpop.f32.mrf.mxu0
  %326 = vdwg.mxu0
  %v327 = vsel %vm253, %v324, 0.0
  %v328 = vrot.slane %v327, 4
  %v329 = vadd.f32 %v327, %v328
  %v330 = vrot.slane %v329, 2
  %v331 = vadd.f32 %v329, %v330
  %v332 = vrot.slane %v331, 1
  %v333 = vadd.f32 %v331, %v332
  %v334 = vmul.f32 %v333, %v126
  %v335 = vsub.f32 %v324, %v334
  %v336 = vmul.f32 %v335, %v335
  %v337 = vsel %vm253, %v336, 0.0
  %v338 = vrot.slane %v337, 4
  %v339 = vadd.f32 %v337, %v338
  %v340 = vrot.slane %v339, 2
  %v341 = vadd.f32 %v339, %v340
  %v342 = vrot.slane %v341, 1
  %v343 = vadd.f32 %v341, %v342
  %v344 = vmul.f32 %v343, %v126
  %v345 = vadd.f32 %v344, 1e-05
  %v346 = vrsqrt.pop %v345
  %v347 = vmul.f32 %v23, %v346
  %v348 = vmul.f32 %v334, %v347
  %v350 = vrot.slane %v348, 7
  %v352 = vsub.f32 %v23, %v350
  %v353 = vlaneseq
  %v354 = vshrl.u32 %v353, 7
  %v355 = vsub.s32 5, %v354
  %v356 = vrot.slane %v347, %v355
  %v357 = vmul.f32 %v324, %v356
  %v358 = vlaneseq
  %v359 = vshrl.u32 %v358, 7
  %v360 = vsub.s32 6, %v359
  %v361 = vrot.slane %v352, %v360
  %v362 = vadd.f32 %v357, %v361
  %v363 = vmul.f32 %v362, 0.2
  %v364 = vmax.f32 %v362, %v363
  %v365 = vld [vmem:[%s4] sm:$0xff]
  %v366 = vld [vmem:[%s4 + $0x8] sm:$0xff]
  %v367 = vlaneseq
  %v368 = vshrl.u32 %v367, 7
  %v369 = vsub.s32 7, %v368
  %v370 = vrot.slane %v23, %v369
  %v372 = vsel %vm253, %v364, 0
  %374 = vmatprep.subr.mxu0 0.0
  %375 = vmatpush1.msra.mxu0 0.0
  %376 = vmatprep.subr.mxu0 0.0
  %377 = vmatpush1.msra.mxu0 0.0
  %378 = vmatprep.subr.mxu0 0.0
  %379 = vmatpush1.msra.mxu0 0.0
  %380 = vmatprep.subr.mxu0 0.0
  %381 = vmatpush1.msra.mxu0 0.0
  %382 = vmatprep.subr.mxu0 0.0
  %383 = vmatpush1.msra.mxu0 0.0
  %384 = vmatprep.subr.mxu0 0.0
  %385 = vmatpush1.msra.mxu0 0.0
  %386 = vmatprep.subr.mxu0 0.0
  %387 = vmatpush1.msra.mxu0 0.0
  %388 = vmatprep.subr.mxu0 0.0
  %389 = vmatpush1.msra.mxu0 0.0
  %390 = vmatprep.subr.mxu0 0.0
  %391 = vmatpush1.msra.mxu0 0.0
  %392 = vmatprep.subr.mxu0 0.0
  %393 = vmatpush1.msra.mxu0 0.0
  %394 = vmatprep.subr.mxu0 0.0
  %395 = vmatpush1.msra.mxu0 0.0
  %396 = vmatprep.subr.mxu0 0.0
  %397 = vmatpush1.msra.mxu0 0.0
  %398 = vmatprep.subr.mxu0 0.0
  %399 = vmatpush1.msra.mxu0 0.0
  %400 = vmatprep.subr.mxu0 0.0
  %401 = vmatpush1.msra.mxu0 0.0
  %402 = vmatprep.subr.mxu0 0.0
  %403 = vmatpush1.msra.mxu0 %v366
  %404 = vmatprep.subr.mxu0 0.0
  %405 = vmatpush1.msra.mxu0 %v365
  %406 = vmatprep.subr.mxu0 0.0
  %407 = vmatpush2.msra.mxu0 0.0
  %408 = vmatprep.subr.mxu0 0.0
  %409 = vmatpush2.msra.mxu0 0.0
  %410 = vmatprep.subr.mxu0 0.0
  %411 = vmatpush2.msra.mxu0 0.0
  %412 = vmatprep.subr.mxu0 0.0
  %413 = vmatpush2.msra.mxu0 0.0
  %414 = vmatprep.subr.mxu0 0.0
  %415 = vmatpush2.msra.mxu0 0.0
  %416 = vmatprep.subr.mxu0 0.0
  %417 = vmatpush2.msra.mxu0 0.0
  %418 = vmatprep.subr.mxu0 0.0
  %419 = vmatpush2.msra.mxu0 0.0
  %420 = vmatprep.subr.mxu0 0.0
  %421 = vmatpush2.msra.mxu0 0.0
  %422 = vmatprep.subr.mxu0 0.0
  %423 = vmatpush2.msra.mxu0 0.0
  %424 = vmatprep.subr.mxu0 0.0
  %425 = vmatpush2.msra.mxu0 0.0
  %426 = vmatprep.subr.mxu0 0.0
  %427 = vmatpush2.msra.mxu0 0.0
  %428 = vmatprep.subr.mxu0 0.0
  %429 = vmatpush2.msra.mxu0 0.0
  %430 = vmatprep.subr.mxu0 0.0
  %431 = vmatpush2.msra.mxu0 0.0
  %432 = vmatprep.subr.mxu0 0.0
  %433 = vmatpush2.msra.mxu0 0.0
  %434 = vmatprep.subr.mxu0 0.0
  %435 = vmatpush2.msra.mxu0 0.0
  %436 = vmatprep.subr.mxu0 0.0
  %437 = vmatpush2.msra.mxu0 0.0
  %438 = vmatprep.mubr.f32.mxu0 0.0
  %439 = vmatmul.mubr.f32.gmra.mxu0 %v372
  %v440 = vpop.f32.mrf.mxu0
  %v441 = vadd.f32 %v370, %v440
  %v442 = vpop.f32.mrf.mxu0
  %443 = vdwg.mxu0
  %vm444 = vcmask 7168
  %445 = vst.msk [vmem:[%s6] sm:$0xff] %vm444, %v441
  // Predicated region
  $region26: #{tpu_custom_call.1} parent=0 // pred_check
    _
  $region27: #{tpu_custom_call.1} parent=0 // pred_check_branch
    %447 = sbr.rel (0) target = $region29
  $region28: #{tpu_custom_call.1} parent=0 // pred_region
    _
  $region29: #{tpu_custom_call.1} parent=0 // pred_fallthru
    _
  // Predicated region
  $region30: #{tpu_custom_call.1} parent=0 // pred_check
    _
  $region31: #{tpu_custom_call.1} parent=0 // pred_check_branch
    %449 = sbr.rel (0) target = $region33
  $region32: #{tpu_custom_call.1} parent=0 // pred_region
    _
  $region33: #{tpu_custom_call.1} parent=0 // pred_fallthru
    _

</llo_original>
